<compile_context>
chip_gen: v5e
topology: v5e:2x2
jax: 0.10.0
libtpu: 0.0.40
codegen_flags: <defaults>
</compile_context>

<pallas_src>
import jax
import jax.numpy as jnp
from jax.experimental import pallas as pl
from jax.experimental.pallas import tpu as pltpu

# Full-f32 matmuls on both the reference and the kernel side so the correctness check
# can be tight (1e-4) instead of the 1e-2 the previous approx-reciprocal version needed.
jax.config.update("jax_default_matmul_precision", "highest")

# --- model config (small, consistent with the module) ---
BLOCK_SIZE = 32           # PyTorch `block_size` (causal buffer size); T <= BLOCK_SIZE
N_EMBD = 32               # model_args['n_embd']
NUM_HEADS = 4
HEAD_SIZE = N_EMBD // NUM_HEADS   # 8
BATCH = 2
SEQ = 8                   # T


def mha_kernel(x_ref, wqkv_ref, wp_ref, bp_ref, bias_ref, vmask_ref, o_ref):
    """Whole-batch multi-head attention in one invocation (no grid).

    x_ref:     (BT, C)      flattened input (BT = B*T)
    wqkv_ref:  (C, 128)     [Wq*scale | Wk | Wv] stacked along lanes, zero-padded to 128
    wp_ref:    (C, 128)     proj.weight.T, lane-padded to 128
    bp_ref:    (1, 128)     proj.bias, lane-padded to 128
    bias_ref:  (BT, H*BT)   block-diagonal causal additive bias (0 / -inf), tiled per head
    vmask_ref: (H*BT, C)    1.0 where row's head block == lane's head block, else 0.0
    o_ref:     (BT, 128)    lane-dense output slab (first C lanes valid)
    """
    bt, c = x_ref.shape
    h = vmask_ref.shape[0] // bt            # number of heads (static at trace time)

    # Fused QKV: one lane-dense MXU matmul for all heads and q/k/v (scale folded into Wq).
    qkv = jnp.dot(x_ref[...], wqkv_ref[...], preferred_element_type=jnp.float32)  # (BT, 128)
    q = qkv[:, 0 * c:1 * c]                 # (BT, C)
    k = qkv[:, 1 * c:2 * c]                 # (BT, C)
    v = qkv[:, 2 * c:3 * c]                 # (BT, C)

    vmask = vmask_ref[...]                  # (H*BT, C)
    # Block-diagonal packing: row block hh keeps only head hh's feature lanes.
    k_bd = jnp.concatenate([k] * h, axis=0) * vmask      # (H*BT, C)
    v_bd = jnp.concatenate([v] * h, axis=0) * vmask      # (H*BT, C)

    # All heads' scores in ONE matmul; contract the feature dims of both operands
    # (NT dot_general) so no explicit k.T is materialized.
    #   s[i, hh*BT + j] = <q_hh[i, :], k_hh[j, :]>
    s = jax.lax.dot_general(q, k_bd, (((1,), (1,)), ((), ())),
                            preferred_element_type=jnp.float32)          # (BT, H*BT)
    s = s + bias_ref[...]                   # precomputed block-diag causal mask (0 / -inf)

    # Per-head softmax.  A shared per-row max is a valid shift for every head block
    # (softmax is shift-invariant per block), so one 64-lane reduce replaces 4 block reduces.
    s = s - jnp.max(s, axis=-1, keepdims=True)
    p = jnp.exp(s)                                                       # (BT, H*BT)

    pv = jnp.dot(p, v_bd, preferred_element_type=jnp.float32)           # (BT, C) concat(heads), unnormalized
    den = jnp.dot(p, vmask, preferred_element_type=jnp.float32)         # (BT, C) per-head row sums (bcast over hs lanes)
    attn = pv / den                          # exact normalization (no approx reciprocal)

    # Single output projection for all heads; bias added once; dropout(p=0.0) is identity.
    # Output lanes padded to 128 -> unmasked, lane-dense store.
    o_ref[...] = (jnp.dot(attn, wp_ref[...], preferred_element_type=jnp.float32)
                  + bp_ref[...]).astype(o_ref.dtype)


def prepare_mha_params(wq, wk, wv, wp_t, bp, *, batch, seq_len, num_heads):
    """One-time (init-time) weight fusion / padding / mask construction."""
    c = wq.shape[0]
    hs = c // num_heads
    bt = batch * seq_len

    # Fold the attention scale (C**-0.5 with C = n_embd, matching the PyTorch code) into Wq,
    # fuse [Wq|Wk|Wv] into one stack, zero-pad the lane dim to 128 (lane-dense MXU RHS).
    scale = c ** -0.5
    wqkv = jnp.concatenate([wq * scale, wk, wv], axis=1)                 # (C, 3C)
    wqkv = jnp.pad(wqkv, ((0, 0), (0, (-wqkv.shape[1]) % 128)))          # (C, 128)
    wp_pad = jnp.pad(wp_t, ((0, 0), (0, (-wp_t.shape[1]) % 128)))        # (C, 128)
    bp_pad = jnp.pad(bp, ((0, 0), (0, (-bp.shape[1]) % 128)))            # (1, 128)

    # Block-diagonal causal additive bias over the flattened (B*T) axis, tiled per head.
    idx = jnp.arange(bt)
    same_batch = (idx[:, None] // seq_len) == (idx[None, :] // seq_len)
    causal = idx[None, :] <= idx[:, None]
    bias_blk = jnp.where(same_batch & causal, 0.0, -jnp.inf).astype(jnp.float32)  # (BT, BT)
    bias = jnp.tile(bias_blk, (1, num_heads))                                     # (BT, H*BT)

    # Head block-structure mask: vmask[r, c] = 1 iff (r // BT) == (c // head_size).
    r = jnp.arange(num_heads * bt)[:, None]
    cc = jnp.arange(c)[None, :]
    vmask = ((r // bt) == (cc // hs)).astype(jnp.float32)                          # (H*BT, C)

    return dict(wqkv=wqkv, wp=wp_pad, bp=bp_pad, bias=bias, vmask=vmask)


@jax.jit
def multi_head_attention(x, wqkv, wp, bp, bias, vmask):
    """x: (B, T, C); remaining args come from prepare_mha_params()."""
    b, t, c = x.shape
    bt = b * t
    out_pad = pl.pallas_call(
        mha_kernel,
        out_shape=jax.ShapeDtypeStruct((bt, wp.shape[1]), x.dtype),
        in_specs=[pl.BlockSpec(memory_space=pltpu.MemorySpace.VMEM)] * 6,
        out_specs=pl.BlockSpec(memory_space=pltpu.MemorySpace.VMEM),
    )(x.reshape(bt, c), wqkv, wp, bp, bias, vmask)
    # Drop the lane padding and restore (B, T, C); fused into the jitted call.
    return out_pad[:, :c].reshape(b, t, c)


def reference(x, wq, wk, wv, wp_t, bp, num_heads):
    """Plain-JAX reference mirroring the PyTorch forward (per-head loop)."""
    b, t, c = x.shape
    hs = c // num_heads
    q = x @ wq
    k = x @ wk
    v = x @ wv
    tril = jnp.tril(jnp.ones((t, t), dtype=bool))
    outs = []
    for h in range(num_heads):
        qh, kh, vh = (a[..., h * hs:(h + 1) * hs] for a in (q, k, v))
        wei = jnp.einsum('btd,bsd->bts', qh, kh) * (c ** -0.5)
        wei = jnp.where(tril, wei, -jnp.inf)
        wei = jax.nn.softmax(wei, axis=-1)
        outs.append(jnp.einsum('bts,bsd->btd', wei, vh))
    cat = jnp.concatenate(outs, axis=-1)
    return cat @ wp_t + bp


if __name__ == "__main__":
    key = jax.random.PRNGKey(0)
    kx, kq, kk, kv, kp, kb = jax.random.split(key, 6)

    # Deterministic synthetic weights; shapes match nn.Linear(n_embd, head_size, bias=False)
    # per head stacked along the output axis, and nn.Linear(n_embd, n_embd) for proj
    # (wp_t = proj.weight.T, bp = proj.bias).
    x = jax.random.normal(kx, (BATCH, SEQ, N_EMBD), dtype=jnp.float32)
    wq = jax.random.normal(kq, (N_EMBD, NUM_HEADS * HEAD_SIZE), dtype=jnp.float32) * 0.1
    wk = jax.random.normal(kk, (N_EMBD, NUM_HEADS * HEAD_SIZE), dtype=jnp.float32) * 0.1
    wv = jax.random.normal(kv, (N_EMBD, NUM_HEADS * HEAD_SIZE), dtype=jnp.float32) * 0.1
    wp_t = jax.random.normal(kp, (N_EMBD, N_EMBD), dtype=jnp.float32) * 0.1
    bp = jax.random.normal(kb, (1, N_EMBD), dtype=jnp.float32) * 0.1

    # One-time weight/mask preparation (init), then a single jitted call per forward.
    params = prepare_mha_params(wq, wk, wv, wp_t, bp,
                                batch=BATCH, seq_len=SEQ, num_heads=NUM_HEADS)

    out = multi_head_attention(x, params["wqkv"], params["wp"], params["bp"],
                               params["bias"], params["vmask"])
    out = jax.block_until_ready(out)

    ref = reference(x, wq, wk, wv, wp_t, bp, NUM_HEADS)
    assert out.shape == (BATCH, SEQ, N_EMBD)
    assert jnp.allclose(out, ref, atol=1e-4, rtol=1e-4), "mismatch vs reference"

    print("KERNEL_OK")
</pallas_src>

<mosaic_0001>
module attributes {stable_mosaic.version = 11 : i64} {
  func.func @mha_kernel(%arg0: memref<16x32xf32, #tpu.memory_space<vmem>>, %arg1: memref<32x128xf32, #tpu.memory_space<vmem>>, %arg2: memref<32x128xf32, #tpu.memory_space<vmem>>, %arg3: memref<1x128xf32, #tpu.memory_space<vmem>>, %arg4: memref<16x64xf32, #tpu.memory_space<vmem>>, %arg5: memref<64x32xf32, #tpu.memory_space<vmem>>, %arg6: memref<16x128xf32, #tpu.memory_space<vmem>>) attributes {dimension_semantics = [], scalar_prefetch = 0 : i64, scratch_operands = 0 : i64, tpu.core_type = #tpu.core_type<tc>} {
    %c0 = arith.constant 0 : index
    %c0_0 = arith.constant 0 : index
    %0 = vector.load %arg0[%c0, %c0_0] : memref<16x32xf32, #tpu.memory_space<vmem>>, vector<16x32xf32>
    %c0_1 = arith.constant 0 : index
    %c0_2 = arith.constant 0 : index
    %1 = vector.load %arg1[%c0_1, %c0_2] : memref<32x128xf32, #tpu.memory_space<vmem>>, vector<32x128xf32>
    %cst = arith.constant dense<0.000000e+00> : vector<16x128xf32>
    %2 = tpu.matmul %0, %1, %cst {dimension_numbers = #tpu.dot_dimension_numbers<[1], [0], [0], [1], [0, 0, 1, 1], [], []>, precision = #tpu.contract_precision<fp32>} : vector<16x32xf32>, vector<32x128xf32>, vector<16x128xf32> -> vector<16x128xf32>
    %3 = vector.extract_strided_slice %2 {offsets = [0, 0], sizes = [16, 32], strides = [1, 1]} : vector<16x128xf32> to vector<16x32xf32>
    %4 = vector.extract_strided_slice %2 {offsets = [0, 32], sizes = [16, 32], strides = [1, 1]} : vector<16x128xf32> to vector<16x32xf32>
    %5 = vector.extract_strided_slice %2 {offsets = [0, 64], sizes = [16, 32], strides = [1, 1]} : vector<16x128xf32> to vector<16x32xf32>
    %c0_3 = arith.constant 0 : index
    %c0_4 = arith.constant 0 : index
    %6 = vector.load %arg5[%c0_3, %c0_4] : memref<64x32xf32, #tpu.memory_space<vmem>>, vector<64x32xf32>
    %7 = tpu.concatenate %4, %4, %4, %4 in 0 : vector<16x32xf32>, vector<16x32xf32>, vector<16x32xf32>, vector<16x32xf32> -> vector<64x32xf32>
    %8 = arith.mulf %7, %6 : vector<64x32xf32>
    %9 = tpu.concatenate %5, %5, %5, %5 in 0 : vector<16x32xf32>, vector<16x32xf32>, vector<16x32xf32>, vector<16x32xf32> -> vector<64x32xf32>
    %10 = arith.mulf %9, %6 : vector<64x32xf32>
    %cst_5 = arith.constant dense<0.000000e+00> : vector<16x64xf32>
    %11 = tpu.matmul %3, %8, %cst_5 {dimension_numbers = #tpu.dot_dimension_numbers<[1], [1], [0], [0], [0, 0, 1, 0], [], []>, precision = #tpu.contract_precision<fp32>} : vector<16x32xf32>, vector<64x32xf32>, vector<16x64xf32> -> vector<16x64xf32>
    %c0_6 = arith.constant 0 : index
    %c0_7 = arith.constant 0 : index
    %12 = vector.load %arg4[%c0_6, %c0_7] : memref<16x64xf32, #tpu.memory_space<vmem>>, vector<16x64xf32>
    %13 = arith.addf %11, %12 : vector<16x64xf32>
    %cst_8 = arith.constant dense<0xFF800000> : vector<16xf32>
    %14 = vector.multi_reduction <maximumf>, %13, %cst_8 [1] : vector<16x64xf32> to vector<16xf32>
    %15 = vector.shape_cast %14 : vector<16xf32> to vector<16x1xf32>
    %16 = vector.broadcast %15 : vector<16x1xf32> to vector<16x64xf32>
    %17 = arith.subf %13, %16 : vector<16x64xf32>
    %18 = math.exp %17 : vector<16x64xf32>
    %cst_9 = arith.constant dense<0.000000e+00> : vector<16x32xf32>
    %19 = tpu.matmul %18, %10, %cst_9 {dimension_numbers = #tpu.dot_dimension_numbers<[1], [0], [0], [1], [0, 0, 1, 1], [], []>, precision = #tpu.contract_precision<fp32>} : vector<16x64xf32>, vector<64x32xf32>, vector<16x32xf32> -> vector<16x32xf32>
    %cst_10 = arith.constant dense<0.000000e+00> : vector<16x32xf32>
    %20 = tpu.matmul %18, %6, %cst_10 {dimension_numbers = #tpu.dot_dimension_numbers<[1], [0], [0], [1], [0, 0, 1, 1], [], []>, precision = #tpu.contract_precision<fp32>} : vector<16x64xf32>, vector<64x32xf32>, vector<16x32xf32> -> vector<16x32xf32>
    %21 = arith.divf %19, %20 : vector<16x32xf32>
    %c0_11 = arith.constant 0 : index
    %c0_12 = arith.constant 0 : index
    %22 = vector.load %arg2[%c0_11, %c0_12] : memref<32x128xf32, #tpu.memory_space<vmem>>, vector<32x128xf32>
    %cst_13 = arith.constant dense<0.000000e+00> : vector<16x128xf32>
    %23 = tpu.matmul %21, %22, %cst_13 {dimension_numbers = #tpu.dot_dimension_numbers<[1], [0], [0], [1], [0, 0, 1, 1], [], []>, precision = #tpu.contract_precision<fp32>} : vector<16x32xf32>, vector<32x128xf32>, vector<16x128xf32> -> vector<16x128xf32>
    %c0_14 = arith.constant 0 : index
    %c0_15 = arith.constant 0 : index
    %24 = vector.load %arg3[%c0_14, %c0_15] : memref<1x128xf32, #tpu.memory_space<vmem>>, vector<1x128xf32>
    %25 = vector.broadcast %24 : vector<1x128xf32> to vector<16x128xf32>
    %26 = arith.addf %23, %25 : vector<16x128xf32>
    %c0_16 = arith.constant 0 : index
    %c0_17 = arith.constant 0 : index
    %27 = vector.load %arg6[%c0_16, %c0_17] : memref<16x128xf32, #tpu.memory_space<vmem>>, vector<16x128xf32>
    tpu.vector_store %arg6[%c0_16, %c0_17], %26 {strides = array<i32>} : memref<16x128xf32, #tpu.memory_space<vmem>>, vector<16x128xf32>,
    return
  }
}

</mosaic_0001>

<llo_original>
// kernel: multi_head_attention.1
$region0: #{multi_head_attention.1}
  #allocation0 [shape = 'u32[]', space=smem, size = 0x4, offset = 0x4, fixed_abs, tag = 'smem constant byte address 0x4 - core index']
  #allocation1 [shape = 'u32[72,128]{1,0:T(1,128)}', space=vmem, size = 0x9000, scoped, tag = 'internal scratch']
  %s0 = inlined_call_operand.vmem [shape: f32[16,32], index: 0, kind: input, shape index: {}]
  %s1 = inlined_call_operand.vmem [shape: f32[32,128], index: 1, kind: input, shape index: {}]
  %s2 = inlined_call_operand.vmem [shape: f32[32,128], index: 2, kind: input, shape index: {}]
  %s3 = inlined_call_operand.vmem [shape: f32[1,128], index: 3, kind: input, shape index: {}]
  %s4 = inlined_call_operand.vmem [shape: f32[16,64], index: 4, kind: input, shape index: {}]
  %s5 = inlined_call_operand.vmem [shape: f32[64,32], index: 5, kind: input, shape index: {}]
  %s6 = inlined_call_operand.vmem [shape: f32[16,128], index: 6, kind: output, shape index: {}]
  %s7 = sld [smem:[#allocation0]]
  $region34: #{multi_head_attention.1} parent=0
    _
  %s9 = ssub.s32 1, %s7
  %s10 = scalar_select 0, %s9, %s7
  // Predicated region
  $region2: #{multi_head_attention.1} parent=0 // pred_check
    _
  $region3: #{multi_head_attention.1} parent=0 // pred_check_branch
    %12 = sbr.rel (0) target = $region5
  $region4: #{multi_head_attention.1} parent=0 // pred_region
    _
  $region5: #{multi_head_attention.1} parent=0 // pred_fallthru
    _
  // Predicated region
  $region6: #{multi_head_attention.1} parent=0 // pred_check
    _
  $region7: #{multi_head_attention.1} parent=0 // pred_check_branch
    %14 = sbr.rel (0) target = $region9
  $region8: #{multi_head_attention.1} parent=0 // pred_region
    _
  $region9: #{multi_head_attention.1} parent=0 // pred_fallthru
    _
  // Predicated region
  $region10: #{multi_head_attention.1} parent=0 // pred_check
    _
  $region11: #{multi_head_attention.1} parent=0 // pred_check_branch
    %16 = sbr.rel (0) target = $region13
  $region12: #{multi_head_attention.1} parent=0 // pred_region
    _
  $region13: #{multi_head_attention.1} parent=0 // pred_fallthru
    _
  // Predicated region
  $region14: #{multi_head_attention.1} parent=0 // pred_check
    _
  $region15: #{multi_head_attention.1} parent=0 // pred_check_branch
    %18 = sbr.rel (0) target = $region17
  $region16: #{multi_head_attention.1} parent=0 // pred_region
    _
  $region17: #{multi_head_attention.1} parent=0 // pred_fallthru
    _
  // Predicated region
  $region18: #{multi_head_attention.1} parent=0 // pred_check
    _
  $region19: #{multi_head_attention.1} parent=0 // pred_check_branch
    %20 = sbr.rel (0) target = $region21
  $region20: #{multi_head_attention.1} parent=0 // pred_region
    _
  $region21: #{multi_head_attention.1} parent=0 // pred_fallthru
    _
  // Predicated region
  $region22: #{multi_head_attention.1} parent=0 // pred_check
    _
  $region23: #{multi_head_attention.1} parent=0 // pred_check_branch
    %22 = sbr.rel (0) target = $region25
  $region24: #{multi_head_attention.1} parent=0 // pred_region
    _
  $region25: #{multi_head_attention.1} parent=0 // pred_fallthru
    _
  %v23 = vld [vmem:[%s0] sm:$0xff]
  %v24 = vld [vmem:[%s0 + $0x8] sm:$0xff]
  %v25 = vld [vmem:[%s1] sm:$0xff]
  %v26 = vld [vmem:[%s1 + $0x8] sm:$0xff]
  %v27 = vld [vmem:[%s1 + $0x10] sm:$0xff]
  %v28 = vld [vmem:[%s1 + $0x18] sm:$0xff]
  %vm29 = vcmask 261120
  %v31 = vsel %vm29, %v23, 0
  %v34 = vsel %vm29, %v24, 0
  %36 = vmatpush.msra.mxu0 0.0
  %37 = vmatpush.msra.mxu0 0.0
  %38 = vmatpush.msra.mxu0 0.0
  %39 = vmatpush.msra.mxu0 0.0
  %40 = vmatpush.msra.mxu0 0.0
  %41 = vmatpush.msra.mxu0 0.0
  %42 = vmatpush.msra.mxu0 0.0
  %43 = vmatpush.msra.mxu0 0.0
  %44 = vmatpush.msra.mxu0 0.0
  %45 = vmatpush.msra.mxu0 0.0
  %46 = vmatpush.msra.mxu0 0.0
  %47 = vmatpush.msra.mxu0 0.0
  %v48 = vand.u32 %v28, 4294901760
  %49 = vmatpush.msra.mxu0 %v48
  %v50 = vand.u32 %v27, 4294901760
  %51 = vmatpush.msra.mxu0 %v50
  %v52 = vand.u32 %v26, 4294901760
  %53 = vmatpush.msra.mxu0 %v52
  %v54 = vand.u32 %v25, 4294901760
  %55 = vmatpush.msra.mxu0 %v54
  %v56 = vand.u32 %v31, 4294901760
  %v57 = vsub.f32 %v31, %v56
  %v58 = vand.u32 %v57, 4294901760
  %v59 = vsub.f32 %v57, %v58
  %v60 = vand.u32 %v59, 4294901760
  %61 = vmatmul.f32.gmra.mxu0 %v60
  %v62 = vpop.f32.mrf.mxu0
  %v63 = vadd.f32 0.0, %v62
  %v64 = vand.u32 %v34, 4294901760
  %v65 = vsub.f32 %v34, %v64
  %v66 = vand.u32 %v65, 4294901760
  %v67 = vsub.f32 %v65, %v66
  %v68 = vand.u32 %v67, 4294901760
  %69 = vmatmul.f32.gmra.mxu0 %v68
  %v70 = vpop.f32.mrf.mxu0
  %v71 = vadd.f32 0.0, %v70
  %72 = vdwg.mxu0
  %73 = vmatpush.msra.mxu0 0.0
  %74 = vmatpush.msra.mxu0 0.0
  %75 = vmatpush.msra.mxu0 0.0
  %76 = vmatpush.msra.mxu0 0.0
  %77 = vmatpush.msra.mxu0 0.0
  %78 = vmatpush.msra.mxu0 0.0
  %79 = vmatpush.msra.mxu0 0.0
  %80 = vmatpush.msra.mxu0 0.0
  %81 = vmatpush.msra.mxu0 0.0
  %82 = vmatpush.msra.mxu0 0.0
  %83 = vmatpush.msra.mxu0 0.0
  %84 = vmatpush.msra.mxu0 0.0
  %v85 = vand.u32 %v28, 4294901760
  %v86 = vsub.f32 %v28, %v85
  %v87 = vand.u32 %v86, 4294901760
  %v88 = vsub.f32 %v86, %v87
  %v89 = vand.u32 %v88, 4294901760
  %90 = vmatpush.msra.mxu0 %v89
  %v91 = vand.u32 %v27, 4294901760
  %v92 = vsub.f32 %v27, %v91
  %v93 = vand.u32 %v92, 4294901760
  %v94 = vsub.f32 %v92, %v93
  %v95 = vand.u32 %v94, 4294901760
  %96 = vmatpush.msra.mxu0 %v95
  %v97 = vand.u32 %v26, 4294901760
  %v98 = vsub.f32 %v26, %v97
  %v99 = vand.u32 %v98, 4294901760
  %v100 = vsub.f32 %v98, %v99
  %v101 = vand.u32 %v100, 4294901760
  %102 = vmatpush.msra.mxu0 %v101
  %v103 = vand.u32 %v25, 4294901760
  %v104 = vsub.f32 %v25, %v103
  %v105 = vand.u32 %v104, 4294901760
  %v106 = vsub.f32 %v104, %v105
  %v107 = vand.u32 %v106, 4294901760
  %108 = vmatpush.msra.mxu0 %v107
  %v109 = vand.u32 %v31, 4294901760
  %110 = vmatmul.f32.gmra.mxu0 %v109
  %v111 = vpop.f32.mrf.mxu0
  %v112 = vadd.f32 %v63, %v111
  %v113 = vand.u32 %v34, 4294901760
  %114 = vmatmul.f32.gmra.mxu0 %v113
  %v115 = vpop.f32.mrf.mxu0
  %v116 = vadd.f32 %v71, %v115
  %117 = vdwg.mxu0
  %118 = vmatpush.msra.mxu0 0.0
  %119 = vmatpush.msra.mxu0 0.0
  %120 = vmatpush.msra.mxu0 0.0
  %121 = vmatpush.msra.mxu0 0.0
  %122 = vmatpush.msra.mxu0 0.0
  %123 = vmatpush.msra.mxu0 0.0
  %124 = vmatpush.msra.mxu0 0.0
  %125 = vmatpush.msra.mxu0 0.0
  %126 = vmatpush.msra.mxu0 0.0
  %127 = vmatpush.msra.mxu0 0.0
  %128 = vmatpush.msra.mxu0 0.0
  %129 = vmatpush.msra.mxu0 0.0
  %v130 = vand.u32 %v28, 4294901760
  %v131 = vsub.f32 %v28, %v130
  %132 = vmatpush.msra.mxu0 %v131
  %v133 = vand.u32 %v27, 4294901760
  %v134 = vsub.f32 %v27, %v133
  %135 = vmatpush.msra.mxu0 %v134
  %v136 = vand.u32 %v26, 4294901760
  %v137 = vsub.f32 %v26, %v136
  %138 = vmatpush.msra.mxu0 %v137
  %v139 = vand.u32 %v25, 4294901760
  %v140 = vsub.f32 %v25, %v139
  %141 = vmatpush.msra.mxu0 %v140
  %v142 = vand.u32 %v31, 4294901760
  %v143 = vsub.f32 %v31, %v142
  %144 = vmatmul.f32.gmra.mxu0 %v143
  %v145 = vpop.f32.mrf.mxu0
  %v146 = vadd.f32 %v112, %v145
  %v147 = vand.u32 %v34, 4294901760
  %v148 = vsub.f32 %v34, %v147
  %149 = vmatmul.f32.gmra.mxu0 %v148
  %v150 = vpop.f32.mrf.mxu0
  %v151 = vadd.f32 %v116, %v150
  %152 = vdwg.mxu0
  %153 = vmatpush.msra.mxu0 0.0
  %154 = vmatpush.msra.mxu0 0.0
  %155 = vmatpush.msra.mxu0 0.0
  %156 = vmatpush.msra.mxu0 0.0
  %157 = vmatpush.msra.mxu0 0.0
  %158 = vmatpush.msra.mxu0 0.0
  %159 = vmatpush.msra.mxu0 0.0
  %160 = vmatpush.msra.mxu0 0.0
  %161 = vmatpush.msra.mxu0 0.0
  %162 = vmatpush.msra.mxu0 0.0
  %163 = vmatpush.msra.mxu0 0.0
  %164 = vmatpush.msra.mxu0 0.0
  %v165 = vand.u32 %v28, 4294901760
  %166 = vmatpush.msra.mxu0 %v165
  %v167 = vand.u32 %v27, 4294901760
  %168 = vmatpush.msra.mxu0 %v167
  %v169 = vand.u32 %v26, 4294901760
  %170 = vmatpush.msra.mxu0 %v169
  %v171 = vand.u32 %v25, 4294901760
  %172 = vmatpush.msra.mxu0 %v171
  %v173 = vand.u32 %v31, 4294901760
  %v174 = vsub.f32 %v31, %v173
  %v175 = vand.u32 %v174, 4294901760
  %176 = vmatmul.f32.gmra.mxu0 %v175
  %v177 = vpop.f32.mrf.mxu0
  %v178 = vadd.f32 %v146, %v177
  %v179 = vand.u32 %v34, 4294901760
  %v180 = vsub.f32 %v34, %v179
  %v181 = vand.u32 %v180, 4294901760
  %182 = vmatmul.f32.gmra.mxu0 %v181
  %v183 = vpop.f32.mrf.mxu0
  %v184 = vadd.f32 %v151, %v183
  %185 = vdwg.mxu0
  %186 = vmatpush.msra.mxu0 0.0
  %187 = vmatpush.msra.mxu0 0.0
  %188 = vmatpush.msra.mxu0 0.0
  %189 = vmatpush.msra.mxu0 0.0
  %190 = vmatpush.msra.mxu0 0.0
  %191 = vmatpush.msra.mxu0 0.0
  %192 = vmatpush.msra.mxu0 0.0
  %193 = vmatpush.msra.mxu0 0.0
  %194 = vmatpush.msra.mxu0 0.0
  %195 = vmatpush.msra.mxu0 0.0
  %196 = vmatpush.msra.mxu0 0.0
  %197 = vmatpush.msra.mxu0 0.0
  %v198 = vand.u32 %v28, 4294901760
  %v199 = vsub.f32 %v28, %v198
  %v200 = vand.u32 %v199, 4294901760
  %201 = vmatpush.msra.mxu0 %v200
  %v202 = vand.u32 %v27, 4294901760
  %v203 = vsub.f32 %v27, %v202
  %v204 = vand.u32 %v203, 4294901760
  %205 = vmatpush.msra.mxu0 %v204
  %v206 = vand.u32 %v26, 4294901760
  %v207 = vsub.f32 %v26, %v206
  %v208 = vand.u32 %v207, 4294901760
  %209 = vmatpush.msra.mxu0 %v208
  %v210 = vand.u32 %v25, 4294901760
  %v211 = vsub.f32 %v25, %v210
  %v212 = vand.u32 %v211, 4294901760
  %213 = vmatpush.msra.mxu0 %v212
  %v214 = vand.u32 %v31, 4294901760
  %215 = vmatmul.f32.gmra.mxu0 %v214
  %v216 = vpop.f32.mrf.mxu0
  %v217 = vadd.f32 %v178, %v216
  %v218 = vand.u32 %v34, 4294901760
  %219 = vmatmul.f32.gmra.mxu0 %v218
  %v220 = vpop.f32.mrf.mxu0
  %v221 = vadd.f32 %v184, %v220
  %222 = vdwg.mxu0
  %223 = vmatpush.msra.mxu0 0.0
  %224 = vmatpush.msra.mxu0 0.0
  %225 = vmatpush.msra.mxu0 0.0
  %226 = vmatpush.msra.mxu0 0.0
  %227 = vmatpush.msra.mxu0 0.0
  %228 = vmatpush.msra.mxu0 0.0
  %229 = vmatpush.msra.mxu0 0.0
  %230 = vmatpush.msra.mxu0 0.0
  %231 = vmatpush.msra.mxu0 0.0
  %232 = vmatpush.msra.mxu0 0.0
  %233 = vmatpush.msra.mxu0 0.0
  %234 = vmatpush.msra.mxu0 0.0
  %v235 = vand.u32 %v28, 4294901760
  %236 = vmatpush.msra.mxu0 %v235
  %v237 = vand.u32 %v27, 4294901760
  %238 = vmatpush.msra.mxu0 %v237
  %v239 = vand.u32 %v26, 4294901760
  %240 = vmatpush.msra.mxu0 %v239
  %v241 = vand.u32 %v25, 4294901760
  %242 = vmatpush.msra.mxu0 %v241
  %v243 = vand.u32 %v31, 4294901760
  %244 = vmatmul.f32.gmra.mxu0 %v243
  %v245 = vpop.f32.mrf.mxu0
  %v246 = vadd.f32 %v217, %v245
  %v247 = vand.u32 %v34, 4294901760
  %248 = vmatmul.f32.gmra.mxu0 %v247
  %v249 = vpop.f32.mrf.mxu0
  %v250 = vadd.f32 %v221, %v249
  %251 = vdwg.mxu0
  %v252 = vld [vmem:[%s5] sm:$0xff]
  %v253 = vld [vmem:[%s5 + $0x8] sm:$0xff]
  %v254 = vld [vmem:[%s5 + $0x10] sm:$0xff]
  %v255 = vld [vmem:[%s5 + $0x18] sm:$0xff]
  %v256 = vld [vmem:[%s5 + $0x20] sm:$0xff]
  %v257 = vld [vmem:[%s5 + $0x28] sm:$0xff]
  %v258 = vld [vmem:[%s5 + $0x30] sm:$0xff]
  %v259 = vld [vmem:[%s5 + $0x38] sm:$0xff]
  %268 = vrot.lane.b32.xlu0 %v252, 32
  %v269 = vpop.permute.xlu0 %268
  %270 = vrot.lane.b32.xlu0 %v253, 32
  %v271 = vpop.permute.xlu0 %270
  %272 = vrot.lane.b32.xlu0 %v254, 32
  %v273 = vpop.permute.xlu0 %272
  %274 = vrot.lane.b32.xlu0 %v255, 32
  %v275 = vpop.permute.xlu0 %274
  %276 = vrot.lane.b32.xlu0 %v256, 32
  %v277 = vpop.permute.xlu0 %276
  %278 = vrot.lane.b32.xlu0 %v257, 32
  %v279 = vpop.permute.xlu0 %278
  %280 = vrot.lane.b32.xlu0 %v258, 32
  %v281 = vpop.permute.xlu0 %280
  %282 = vrot.lane.b32.xlu0 %v259, 32
  %v283 = vpop.permute.xlu0 %282
  %v292 = vmul.f32 %v246, %v269
  %v293 = vmul.f32 %v250, %v271
  %v294 = vmul.f32 %v246, %v273
  %v295 = vmul.f32 %v250, %v275
  %v296 = vmul.f32 %v246, %v277
  %v297 = vmul.f32 %v250, %v279
  %v298 = vmul.f32 %v246, %v281
  %v299 = vmul.f32 %v250, %v283
  %300 = vrot.lane.b32.xlu0 %v252, 64
  %v301 = vpop.permute.xlu0 %300
  %302 = vrot.lane.b32.xlu0 %v253, 64
  %v303 = vpop.permute.xlu0 %302
  %304 = vrot.lane.b32.xlu0 %v254, 64
  %v305 = vpop.permute.xlu0 %304
  %306 = vrot.lane.b32.xlu0 %v255, 64
  %v307 = vpop.permute.xlu0 %306
  %308 = vrot.lane.b32.xlu0 %v256, 64
  %v309 = vpop.permute.xlu0 %308
  %310 = vrot.lane.b32.xlu0 %v257, 64
  %v311 = vpop.permute.xlu0 %310
  %312 = vrot.lane.b32.xlu0 %v258, 64
  %v313 = vpop.permute.xlu0 %312
  %314 = vrot.lane.b32.xlu0 %v259, 64
  %v315 = vpop.permute.xlu0 %314
  %v324 = vmul.f32 %v246, %v301
  %v325 = vmul.f32 %v250, %v303
  %v326 = vmul.f32 %v246, %v305
  %v327 = vmul.f32 %v250, %v307
  %v328 = vmul.f32 %v246, %v309
  %v329 = vmul.f32 %v250, %v311
  %v330 = vmul.f32 %v246, %v313
  %v331 = vmul.f32 %v250, %v315
  %v332 = vld [vmem:[%s4] sm:$0xff]
  %v333 = vld [vmem:[%s4 + $0x8] sm:$0xff]
  %342 = vrot.lane.b32.xlu0 %v292, 96
  %v343 = vpop.permute.xlu0 %342
  %344 = vrot.lane.b32.xlu0 %v293, 96
  %v345 = vpop.permute.xlu0 %344
  %346 = vrot.lane.b32.xlu0 %v294, 96
  %v347 = vpop.permute.xlu0 %346
  %348 = vrot.lane.b32.xlu0 %v295, 96
  %v349 = vpop.permute.xlu0 %348
  %350 = vrot.lane.b32.xlu0 %v296, 96
  %v351 = vpop.permute.xlu0 %350
  %352 = vrot.lane.b32.xlu0 %v297, 96
  %v353 = vpop.permute.xlu0 %352
  %354 = vrot.lane.b32.xlu0 %v298, 96
  %v355 = vpop.permute.xlu0 %354
  %356 = vrot.lane.b32.xlu0 %v299, 96
  %v357 = vpop.permute.xlu0 %356
  %v359 = vsel %vm29, %v246, 0
  %v362 = vsel %vm29, %v250, 0
  %v364 = vsel %vm29, %v343, 0
  %v366 = vsel %vm29, %v345, 0
  %v368 = vsel %vm29, %v347, 0
  %v370 = vsel %vm29, %v349, 0
  %v372 = vsel %vm29, %v351, 0
  %v374 = vsel %vm29, %v353, 0
  %v376 = vsel %vm29, %v355, 0
  %v378 = vsel %vm29, %v357, 0
  %380 = vmatpush.xpose.msra.mxu0 0.0
  %381 = vmatpush.xpose.msra.mxu0 0.0
  %382 = vmatpush.xpose.msra.mxu0 0.0
  %383 = vmatpush.xpose.msra.mxu0 0.0
  %384 = vmatpush.xpose.msra.mxu0 0.0
  %385 = vmatpush.xpose.msra.mxu0 0.0
  %386 = vmatpush.xpose.msra.mxu0 0.0
  %387 = vmatpush.xpose.msra.mxu0 0.0
  %v388 = vand.u32 %v378, 4294901760
  %389 = vmatpush.xpose.msra.mxu0 %v388
  %v390 = vand.u32 %v376, 4294901760
  %391 = vmatpush.xpose.msra.mxu0 %v390
  %v392 = vand.u32 %v374, 4294901760
  %393 = vmatpush.xpose.msra.mxu0 %v392
  %v394 = vand.u32 %v372, 4294901760
  %395 = vmatpush.xpose.msra.mxu0 %v394
  %v396 = vand.u32 %v370, 4294901760
  %397 = vmatpush.xpose.msra.mxu0 %v396
  %v398 = vand.u32 %v368, 4294901760
  %399 = vmatpush.xpose.msra.mxu0 %v398
  %v400 = vand.u32 %v366, 4294901760
  %401 = vmatpush.xpose.msra.mxu0 %v400
  %v402 = vand.u32 %v364, 4294901760
  %403 = vmatpush.xpose.msra.mxu0 %v402
  %v404 = vand.u32 %v359, 4294901760
  %v405 = vsub.f32 %v359, %v404
  %v406 = vand.u32 %v405, 4294901760
  %v407 = vsub.f32 %v405, %v406
  %v408 = vand.u32 %v407, 4294901760
  %409 = vmatmul.f32.gmra.mxu0 %v408
  %v410 = vpop.f32.mrf.mxu0
  %v411 = vadd.f32 %v332, %v410
  %v412 = vand.u32 %v362, 4294901760
  %v413 = vsub.f32 %v362, %v412
  %v414 = vand.u32 %v413, 4294901760
  %v415 = vsub.f32 %v413, %v414
  %v416 = vand.u32 %v415, 4294901760
  %417 = vmatmul.f32.gmra.mxu0 %v416
  %v418 = vpop.f32.mrf.mxu0
  %v419 = vadd.f32 %v333, %v418
  %420 = vdwg.mxu0
  %421 = vmatpush.xpose.msra.mxu0 0.0
  %422 = vmatpush.xpose.msra.mxu0 0.0
  %423 = vmatpush.xpose.msra.mxu0 0.0
  %424 = vmatpush.xpose.msra.mxu0 0.0
  %425 = vmatpush.xpose.msra.mxu0 0.0
  %426 = vmatpush.xpose.msra.mxu0 0.0
  %427 = vmatpush.xpose.msra.mxu0 0.0
  %428 = vmatpush.xpose.msra.mxu0 0.0
  %v429 = vand.u32 %v378, 4294901760
  %v430 = vsub.f32 %v378, %v429
  %v431 = vand.u32 %v430, 4294901760
  %v432 = vsub.f32 %v430, %v431
  %v433 = vand.u32 %v432, 4294901760
  %434 = vmatpush.xpose.msra.mxu0 %v433
  %v435 = vand.u32 %v376, 4294901760
  %v436 = vsub.f32 %v376, %v435
  %v437 = vand.u32 %v436, 4294901760
  %v438 = vsub.f32 %v436, %v437
  %v439 = vand.u32 %v438, 4294901760
  %440 = vmatpush.xpose.msra.mxu0 %v439
  %v441 = vand.u32 %v374, 4294901760
  %v442 = vsub.f32 %v374, %v441
  %v443 = vand.u32 %v442, 4294901760
  %v444 = vsub.f32 %v442, %v443
  %v445 = vand.u32 %v444, 4294901760
  %446 = vmatpush.xpose.msra.mxu0 %v445
  %v447 = vand.u32 %v372, 4294901760
  %v448 = vsub.f32 %v372, %v447
  %v449 = vand.u32 %v448, 4294901760
  %v450 = vsub.f32 %v448, %v449
  %v451 = vand.u32 %v450, 4294901760
  %452 = vmatpush.xpose.msra.mxu0 %v451
  %v453 = vand.u32 %v370, 4294901760
  %v454 = vsub.f32 %v370, %v453
  %v455 = vand.u32 %v454, 4294901760
  %v456 = vsub.f32 %v454, %v455
  %v457 = vand.u32 %v456, 4294901760
  %458 = vmatpush.xpose.msra.mxu0 %v457
  %v459 = vand.u32 %v368, 4294901760
  %v460 = vsub.f32 %v368, %v459
  %v461 = vand.u32 %v460, 4294901760
  %v462 = vsub.f32 %v460, %v461
  %v463 = vand.u32 %v462, 4294901760
  %464 = vmatpush.xpose.msra.mxu0 %v463
  %v465 = vand.u32 %v366, 4294901760
  %v466 = vsub.f32 %v366, %v465
  %v467 = vand.u32 %v466, 4294901760
  %v468 = vsub.f32 %v466, %v467
  %v469 = vand.u32 %v468, 4294901760
  %470 = vmatpush.xpose.msra.mxu0 %v469
  %v471 = vand.u32 %v364, 4294901760
  %v472 = vsub.f32 %v364, %v471
  %v473 = vand.u32 %v472, 4294901760
  %v474 = vsub.f32 %v472, %v473
  %v475 = vand.u32 %v474, 4294901760
  %476 = vmatpush.xpose.msra.mxu0 %v475
  %v477 = vand.u32 %v359, 4294901760
  %478 = vmatmul.f32.gmra.mxu0 %v477
  %v479 = vpop.f32.mrf.mxu0
  %v480 = vadd.f32 %v411, %v479
  %v481 = vand.u32 %v362, 4294901760
  %482 = vmatmul.f32.gmra.mxu0 %v481
  %v483 = vpop.f32.mrf.mxu0
  %v484 = vadd.f32 %v419, %v483
  %485 = vdwg.mxu0
  %486 = vmatpush.xpose.msra.mxu0 0.0
  %487 = vmatpush.xpose.msra.mxu0 0.0
  %488 = vmatpush.xpose.msra.mxu0 0.0
  %489 = vmatpush.xpose.msra.mxu0 0.0
  %490 = vmatpush.xpose.msra.mxu0 0.0
  %491 = vmatpush.xpose.msra.mxu0 0.0
  %492 = vmatpush.xpose.msra.mxu0 0.0
  %493 = vmatpush.xpose.msra.mxu0 0.0
  %v494 = vand.u32 %v378, 4294901760
  %v495 = vsub.f32 %v378, %v494
  %496 = vmatpush.xpose.msra.mxu0 %v495
  %v497 = vand.u32 %v376, 4294901760
  %v498 = vsub.f32 %v376, %v497
  %499 = vmatpush.xpose.msra.mxu0 %v498
  %v500 = vand.u32 %v374, 4294901760
  %v501 = vsub.f32 %v374, %v500
  %502 = vmatpush.xpose.msra.mxu0 %v501
  %v503 = vand.u32 %v372, 4294901760
  %v504 = vsub.f32 %v372, %v503
  %505 = vmatpush.xpose.msra.mxu0 %v504
  %v506 = vand.u32 %v370, 4294901760
  %v507 = vsub.f32 %v370, %v506
  %508 = vmatpush.xpose.msra.mxu0 %v507
  %v509 = vand.u32 %v368, 4294901760
  %v510 = vsub.f32 %v368, %v509
  %511 = vmatpush.xpose.msra.mxu0 %v510
  %v512 = vand.u32 %v366, 4294901760
  %v513 = vsub.f32 %v366, %v512
  %514 = vmatpush.xpose.msra.mxu0 %v513
  %v515 = vand.u32 %v364, 4294901760
  %v516 = vsub.f32 %v364, %v515
  %517 = vmatpush.xpose.msra.mxu0 %v516
  %v518 = vand.u32 %v359, 4294901760
  %v519 = vsub.f32 %v359, %v518
  %520 = vmatmul.f32.gmra.mxu0 %v519
  %v521 = vpop.f32.mrf.mxu0
  %v522 = vadd.f32 %v480, %v521
  %v523 = vand.u32 %v362, 4294901760
  %v524 = vsub.f32 %v362, %v523
  %525 = vmatmul.f32.gmra.mxu0 %v524
  %v526 = vpop.f32.mrf.mxu0
  %v527 = vadd.f32 %v484, %v526
  %528 = vdwg.mxu0
  %529 = vmatpush.xpose.msra.mxu0 0.0
  %530 = vmatpush.xpose.msra.mxu0 0.0
  %531 = vmatpush.xpose.msra.mxu0 0.0
  %532 = vmatpush.xpose.msra.mxu0 0.0
  %533 = vmatpush.xpose.msra.mxu0 0.0
  %534 = vmatpush.xpose.msra.mxu0 0.0
  %535 = vmatpush.xpose.msra.mxu0 0.0
  %536 = vmatpush.xpose.msra.mxu0 0.0
  %v537 = vand.u32 %v378, 4294901760
  %538 = vmatpush.xpose.msra.mxu0 %v537
  %v539 = vand.u32 %v376, 4294901760
  %540 = vmatpush.xpose.msra.mxu0 %v539
  %v541 = vand.u32 %v374, 4294901760
  %542 = vmatpush.xpose.msra.mxu0 %v541
  %v543 = vand.u32 %v372, 4294901760
  %544 = vmatpush.xpose.msra.mxu0 %v543
  %v545 = vand.u32 %v370, 4294901760
  %546 = vmatpush.xpose.msra.mxu0 %v545
  %v547 = vand.u32 %v368, 4294901760
  %548 = vmatpush.xpose.msra.mxu0 %v547
  %v549 = vand.u32 %v366, 4294901760
  %550 = vmatpush.xpose.msra.mxu0 %v549
  %v551 = vand.u32 %v364, 4294901760
  %552 = vmatpush.xpose.msra.mxu0 %v551
  %v553 = vand.u32 %v359, 4294901760
  %v554 = vsub.f32 %v359, %v553
  %v555 = vand.u32 %v554, 4294901760
  %556 = vmatmul.f32.gmra.mxu0 %v555
  %v557 = vpop.f32.mrf.mxu0
  %v558 = vadd.f32 %v522, %v557
  %v559 = vand.u32 %v362, 4294901760
  %v560 = vsub.f32 %v362, %v559
  %v561 = vand.u32 %v560, 4294901760
  %562 = vmatmul.f32.gmra.mxu0 %v561
  %v563 = vpop.f32.mrf.mxu0
  %v564 = vadd.f32 %v527, %v563
  %565 = vdwg.mxu0
  %566 = vmatpush.xpose.msra.mxu0 0.0
  %567 = vmatpush.xpose.msra.mxu0 0.0
  %568 = vmatpush.xpose.msra.mxu0 0.0
  %569 = vmatpush.xpose.msra.mxu0 0.0
  %570 = vmatpush.xpose.msra.mxu0 0.0
  %571 = vmatpush.xpose.msra.mxu0 0.0
  %572 = vmatpush.xpose.msra.mxu0 0.0
  %573 = vmatpush.xpose.msra.mxu0 0.0
  %v574 = vand.u32 %v378, 4294901760
  %v575 = vsub.f32 %v378, %v574
  %v576 = vand.u32 %v575, 4294901760
  %577 = vmatpush.xpose.msra.mxu0 %v576
  %v578 = vand.u32 %v376, 4294901760
  %v579 = vsub.f32 %v376, %v578
  %v580 = vand.u32 %v579, 4294901760
  %581 = vmatpush.xpose.msra.mxu0 %v580
  %v582 = vand.u32 %v374, 4294901760
  %v583 = vsub.f32 %v374, %v582
  %v584 = vand.u32 %v583, 4294901760
  %585 = vmatpush.xpose.msra.mxu0 %v584
  %v586 = vand.u32 %v372, 4294901760
  %v587 = vsub.f32 %v372, %v586
  %v588 = vand.u32 %v587, 4294901760
  %589 = vmatpush.xpose.msra.mxu0 %v588
  %v590 = vand.u32 %v370, 4294901760
  %v591 = vsub.f32 %v370, %v590
  %v592 = vand.u32 %v591, 4294901760
  %593 = vmatpush.xpose.msra.mxu0 %v592
  %v594 = vand.u32 %v368, 4294901760
  %v595 = vsub.f32 %v368, %v594
  %v596 = vand.u32 %v595, 4294901760
  %597 = vmatpush.xpose.msra.mxu0 %v596
  %v598 = vand.u32 %v366, 4294901760
  %v599 = vsub.f32 %v366, %v598
  %v600 = vand.u32 %v599, 4294901760
  %601 = vmatpush.xpose.msra.mxu0 %v600
  %v602 = vand.u32 %v364, 4294901760
  %v603 = vsub.f32 %v364, %v602
  %v604 = vand.u32 %v603, 4294901760
  %605 = vmatpush.xpose.msra.mxu0 %v604
  %v606 = vand.u32 %v359, 4294901760
  %607 = vmatmul.f32.gmra.mxu0 %v606
  %v608 = vpop.f32.mrf.mxu0
  %v609 = vadd.f32 %v558, %v608
  %v610 = vand.u32 %v362, 4294901760
  %611 = vmatmul.f32.gmra.mxu0 %v610
  %v612 = vpop.f32.mrf.mxu0
  %v613 = vadd.f32 %v564, %v612
  %614 = vdwg.mxu0
  %615 = vmatpush.xpose.msra.mxu0 0.0
  %616 = vmatpush.xpose.msra.mxu0 0.0
  %617 = vmatpush.xpose.msra.mxu0 0.0
  %618 = vmatpush.xpose.msra.mxu0 0.0
  %619 = vmatpush.xpose.msra.mxu0 0.0
  %620 = vmatpush.xpose.msra.mxu0 0.0
  %621 = vmatpush.xpose.msra.mxu0 0.0
  %622 = vmatpush.xpose.msra.mxu0 0.0
  %v623 = vand.u32 %v378, 4294901760
  %624 = vmatpush.xpose.msra.mxu0 %v623
  %v625 = vand.u32 %v376, 4294901760
  %626 = vmatpush.xpose.msra.mxu0 %v625
  %v627 = vand.u32 %v374, 4294901760
  %628 = vmatpush.xpose.msra.mxu0 %v627
  %v629 = vand.u32 %v372, 4294901760
  %630 = vmatpush.xpose.msra.mxu0 %v629
  %v631 = vand.u32 %v370, 4294901760
  %632 = vmatpush.xpose.msra.mxu0 %v631
  %v633 = vand.u32 %v368, 4294901760
  %634 = vmatpush.xpose.msra.mxu0 %v633
  %v635 = vand.u32 %v366, 4294901760
  %636 = vmatpush.xpose.msra.mxu0 %v635
  %v637 = vand.u32 %v364, 4294901760
  %638 = vmatpush.xpose.msra.mxu0 %v637
  %v639 = vand.u32 %v359, 4294901760
  %640 = vmatmul.f32.gmra.mxu0 %v639
  %v641 = vpop.f32.mrf.mxu0
  %v642 = vadd.f32 %v609, %v641
  %v643 = vand.u32 %v362, 4294901760
  %644 = vmatmul.f32.gmra.mxu0 %v643
  %v645 = vpop.f32.mrf.mxu0
  %v646 = vadd.f32 %v613, %v645
  %647 = vdwg.mxu0
  %vm648 = vcmask 523264
  %v649 = vsel %vm648, %v642, -inf
  %650 = vmax.xlane.f32.xlu0 %v649
  %v651 = vpop.xlane.xlu0 %650
  %v652 = vsel %vm648, %v646, -inf
  %653 = vmax.xlane.f32.xlu0 %v652
  %v654 = vpop.xlane.xlu0 %653
  %v655 = vsub.f32 %v642, %v651
  %v656 = vsub.f32 %v646, %v654
  %v657 = vmul.f32 %v655, 1.442695
  %v658 = vpow.pop %v657
  %v659 = vmul.f32 %v656, 1.442695
  %v660 = vpow.pop %v659
  %669 = vrot.lane.b32.xlu0 %v324, 64
  %v670 = vpop.permute.xlu0 %669
  %671 = vrot.lane.b32.xlu0 %v325, 64
  %v672 = vpop.permute.xlu0 %671
  %673 = vrot.lane.b32.xlu0 %v326, 64
  %v674 = vpop.permute.xlu0 %673
  %675 = vrot.lane.b32.xlu0 %v327, 64
  %v676 = vpop.permute.xlu0 %675
  %677 = vrot.lane.b32.xlu0 %v328, 64
  %v678 = vpop.permute.xlu0 %677
  %679 = vrot.lane.b32.xlu0 %v329, 64
  %v680 = vpop.permute.xlu0 %679
  %681 = vrot.lane.b32.xlu0 %v330, 64
  %v682 = vpop.permute.xlu0 %681
  %683 = vrot.lane.b32.xlu0 %v331, 64
  %v684 = vpop.permute.xlu0 %683
  %v694 = vsel %vm648, %v658, 0
  %v697 = vsel %vm648, %v660, 0
  %699 = vmatpush.msra.mxu0 0.0
  %700 = vmatpush.msra.mxu0 0.0
  %701 = vmatpush.msra.mxu0 0.0
  %702 = vmatpush.msra.mxu0 0.0
  %703 = vmatpush.msra.mxu0 0.0
  %704 = vmatpush.msra.mxu0 0.0
  %705 = vmatpush.msra.mxu0 0.0
  %706 = vmatpush.msra.mxu0 0.0
  %v707 = vand.u32 %v684, 4294901760
  %708 = vmatpush.msra.mxu0 %v707
  %v709 = vand.u32 %v682, 4294901760
  %710 = vmatpush.msra.mxu0 %v709
  %v711 = vand.u32 %v680, 4294901760
  %712 = vmatpush.msra.mxu0 %v711
  %v713 = vand.u32 %v678, 4294901760
  %714 = vmatpush.msra.mxu0 %v713
  %v715 = vand.u32 %v676, 4294901760
  %716 = vmatpush.msra.mxu0 %v715
  %v717 = vand.u32 %v674, 4294901760
  %718 = vmatpush.msra.mxu0 %v717
  %v719 = vand.u32 %v672, 4294901760
  %720 = vmatpush.msra.mxu0 %v719
  %v721 = vand.u32 %v670, 4294901760
  %722 = vmatpush.msra.mxu0 %v721
  %v723 = vand.u32 %v694, 4294901760
  %v724 = vsub.f32 %v694, %v723
  %v725 = vand.u32 %v724, 4294901760
  %v726 = vsub.f32 %v724, %v725
  %v727 = vand.u32 %v726, 4294901760
  %728 = vmatmul.f32.gmra.mxu0 %v727
  %v729 = vpop.f32.mrf.mxu0
  %v730 = vadd.f32 0.0, %v729
  %v731 = vand.u32 %v697, 4294901760
  %v732 = vsub.f32 %v697, %v731
  %v733 = vand.u32 %v732, 4294901760
  %v734 = vsub.f32 %v732, %v733
  %v735 = vand.u32 %v734, 4294901760
  %736 = vmatmul.f32.gmra.mxu0 %v735
  %v737 = vpop.f32.mrf.mxu0
  %v738 = vadd.f32 0.0, %v737
  %739 = vdwg.mxu0
  %740 = vmatpush.msra.mxu0 0.0
  %741 = vmatpush.msra.mxu0 0.0
  %742 = vmatpush.msra.mxu0 0.0
  %743 = vmatpush.msra.mxu0 0.0
  %744 = vmatpush.msra.mxu0 0.0
  %745 = vmatpush.msra.mxu0 0.0
  %746 = vmatpush.msra.mxu0 0.0
  %747 = vmatpush.msra.mxu0 0.0
  %v748 = vand.u32 %v684, 4294901760
  %v749 = vsub.f32 %v684, %v748
  %v750 = vand.u32 %v749, 4294901760
  %v751 = vsub.f32 %v749, %v750
  %v752 = vand.u32 %v751, 4294901760
  %753 = vmatpush.msra.mxu0 %v752
  %v754 = vand.u32 %v682, 4294901760
  %v755 = vsub.f32 %v682, %v754
  %v756 = vand.u32 %v755, 4294901760
  %v757 = vsub.f32 %v755, %v756
  %v758 = vand.u32 %v757, 4294901760
  %759 = vmatpush.msra.mxu0 %v758
  %v760 = vand.u32 %v680, 4294901760
  %v761 = vsub.f32 %v680, %v760
  %v762 = vand.u32 %v761, 4294901760
  %v763 = vsub.f32 %v761, %v762
  %v764 = vand.u32 %v763, 4294901760
  %765 = vmatpush.msra.mxu0 %v764
  %v766 = vand.u32 %v678, 4294901760
  %v767 = vsub.f32 %v678, %v766
  %v768 = vand.u32 %v767, 4294901760
  %v769 = vsub.f32 %v767, %v768
  %v770 = vand.u32 %v769, 4294901760
  %771 = vmatpush.msra.mxu0 %v770
  %v772 = vand.u32 %v676, 4294901760
  %v773 = vsub.f32 %v676, %v772
  %v774 = vand.u32 %v773, 4294901760
  %v775 = vsub.f32 %v773, %v774
  %v776 = vand.u32 %v775, 4294901760
  %777 = vmatpush.msra.mxu0 %v776
  %v778 = vand.u32 %v674, 4294901760
  %v779 = vsub.f32 %v674, %v778
  %v780 = vand.u32 %v779, 4294901760
  %v781 = vsub.f32 %v779, %v780
  %v782 = vand.u32 %v781, 4294901760
  %783 = vmatpush.msra.mxu0 %v782
  %v784 = vand.u32 %v672, 4294901760
  %v785 = vsub.f32 %v672, %v784
  %v786 = vand.u32 %v785, 4294901760
  %v787 = vsub.f32 %v785, %v786
  %v788 = vand.u32 %v787, 4294901760
  %789 = vmatpush.msra.mxu0 %v788
  %v790 = vand.u32 %v670, 4294901760
  %v791 = vsub.f32 %v670, %v790
  %v792 = vand.u32 %v791, 4294901760
  %v793 = vsub.f32 %v791, %v792
  %v794 = vand.u32 %v793, 4294901760
  %795 = vmatpush.msra.mxu0 %v794
  %v796 = vand.u32 %v694, 4294901760
  %797 = vmatmul.f32.gmra.mxu0 %v796
  %v798 = vpop.f32.mrf.mxu0
  %v799 = vadd.f32 %v730, %v798
  %v800 = vand.u32 %v697, 4294901760
  %801 = vmatmul.f32.gmra.mxu0 %v800
  %v802 = vpop.f32.mrf.mxu0
  %v803 = vadd.f32 %v738, %v802
  %804 = vdwg.mxu0
  %805 = vmatpush.msra.mxu0 0.0
  %806 = vmatpush.msra.mxu0 0.0
  %807 = vmatpush.msra.mxu0 0.0
  %808 = vmatpush.msra.mxu0 0.0
  %809 = vmatpush.msra.mxu0 0.0
  %810 = vmatpush.msra.mxu0 0.0
  %811 = vmatpush.msra.mxu0 0.0
  %812 = vmatpush.msra.mxu0 0.0
  %v813 = vand.u32 %v684, 4294901760
  %v814 = vsub.f32 %v684, %v813
  %815 = vmatpush.msra.mxu0 %v814
  %v816 = vand.u32 %v682, 4294901760
  %v817 = vsub.f32 %v682, %v816
  %818 = vmatpush.msra.mxu0 %v817
  %v819 = vand.u32 %v680, 4294901760
  %v820 = vsub.f32 %v680, %v819
  %821 = vmatpush.msra.mxu0 %v820
  %v822 = vand.u32 %v678, 4294901760
  %v823 = vsub.f32 %v678, %v822
  %824 = vmatpush.msra.mxu0 %v823
  %v825 = vand.u32 %v676, 4294901760
  %v826 = vsub.f32 %v676, %v825
  %827 = vmatpush.msra.mxu0 %v826
  %v828 = vand.u32 %v674, 4294901760
  %v829 = vsub.f32 %v674, %v828
  %830 = vmatpush.msra.mxu0 %v829
  %v831 = vand.u32 %v672, 4294901760
  %v832 = vsub.f32 %v672, %v831
  %833 = vmatpush.msra.mxu0 %v832
  %v834 = vand.u32 %v670, 4294901760
  %v835 = vsub.f32 %v670, %v834
  %836 = vmatpush.msra.mxu0 %v835
  %v837 = vand.u32 %v694, 4294901760
  %v838 = vsub.f32 %v694, %v837
  %839 = vmatmul.f32.gmra.mxu0 %v838
  %v840 = vpop.f32.mrf.mxu0
  %v841 = vadd.f32 %v799, %v840
  %v842 = vand.u32 %v697, 4294901760
  %v843 = vsub.f32 %v697, %v842
  %844 = vmatmul.f32.gmra.mxu0 %v843
  %v845 = vpop.f32.mrf.mxu0
  %v846 = vadd.f32 %v803, %v845
  %847 = vdwg.mxu0
  %848 = vmatpush.msra.mxu0 0.0
  %849 = vmatpush.msra.mxu0 0.0
  %850 = vmatpush.msra.mxu0 0.0
  %851 = vmatpush.msra.mxu0 0.0
  %852 = vmatpush.msra.mxu0 0.0
  %853 = vmatpush.msra.mxu0 0.0
  %854 = vmatpush.msra.mxu0 0.0
  %855 = vmatpush.msra.mxu0 0.0
  %v856 = vand.u32 %v684, 4294901760
  %857 = vmatpush.msra.mxu0 %v856
  %v858 = vand.u32 %v682, 4294901760
  %859 = vmatpush.msra.mxu0 %v858
  %v860 = vand.u32 %v680, 4294901760
  %861 = vmatpush.msra.mxu0 %v860
  %v862 = vand.u32 %v678, 4294901760
  %863 = vmatpush.msra.mxu0 %v862
  %v864 = vand.u32 %v676, 4294901760
  %865 = vmatpush.msra.mxu0 %v864
  %v866 = vand.u32 %v674, 4294901760
  %867 = vmatpush.msra.mxu0 %v866
  %v868 = vand.u32 %v672, 4294901760
  %869 = vmatpush.msra.mxu0 %v868
  %v870 = vand.u32 %v670, 4294901760
  %871 = vmatpush.msra.mxu0 %v870
  %v872 = vand.u32 %v694, 4294901760
  %v873 = vsub.f32 %v694, %v872
  %v874 = vand.u32 %v873, 4294901760
  %875 = vmatmul.f32.gmra.mxu0 %v874
  %v876 = vpop.f32.mrf.mxu0
  %v877 = vadd.f32 %v841, %v876
  %v878 = vand.u32 %v697, 4294901760
  %v879 = vsub.f32 %v697, %v878
  %v880 = vand.u32 %v879, 4294901760
  %881 = vmatmul.f32.gmra.mxu0 %v880
  %v882 = vpop.f32.mrf.mxu0
  %v883 = vadd.f32 %v846, %v882
  %884 = vdwg.mxu0
  %885 = vmatpush.msra.mxu0 0.0
  %886 = vmatpush.msra.mxu0 0.0
  %887 = vmatpush.msra.mxu0 0.0
  %888 = vmatpush.msra.mxu0 0.0
  %889 = vmatpush.msra.mxu0 0.0
  %890 = vmatpush.msra.mxu0 0.0
  %891 = vmatpush.msra.mxu0 0.0
  %892 = vmatpush.msra.mxu0 0.0
  %v893 = vand.u32 %v684, 4294901760
  %v894 = vsub.f32 %v684, %v893
  %v895 = vand.u32 %v894, 4294901760
  %896 = vmatpush.msra.mxu0 %v895
  %v897 = vand.u32 %v682, 4294901760
  %v898 = vsub.f32 %v682, %v897
  %v899 = vand.u32 %v898, 4294901760
  %900 = vmatpush.msra.mxu0 %v899
  %v901 = vand.u32 %v680, 4294901760
  %v902 = vsub.f32 %v680, %v901
  %v903 = vand.u32 %v902, 4294901760
  %904 = vmatpush.msra.mxu0 %v903
  %v905 = vand.u32 %v678, 4294901760
  %v906 = vsub.f32 %v678, %v905
  %v907 = vand.u32 %v906, 4294901760
  %908 = vmatpush.msra.mxu0 %v907
  %v909 = vand.u32 %v676, 4294901760
  %v910 = vsub.f32 %v676, %v909
  %v911 = vand.u32 %v910, 4294901760
  %912 = vmatpush.msra.mxu0 %v911
  %v913 = vand.u32 %v674, 4294901760
  %v914 = vsub.f32 %v674, %v913
  %v915 = vand.u32 %v914, 4294901760
  %916 = vmatpush.msra.mxu0 %v915
  %v917 = vand.u32 %v672, 4294901760
  %v918 = vsub.f32 %v672, %v917
  %v919 = vand.u32 %v918, 4294901760
  %920 = vmatpush.msra.mxu0 %v919
  %v921 = vand.u32 %v670, 4294901760
  %v922 = vsub.f32 %v670, %v921
  %v923 = vand.u32 %v922, 4294901760
  %924 = vmatpush.msra.mxu0 %v923
  %v925 = vand.u32 %v694, 4294901760
  %926 = vmatmul.f32.gmra.mxu0 %v925
  %v927 = vpop.f32.mrf.mxu0
  %v928 = vadd.f32 %v877, %v927
  %v929 = vand.u32 %v697, 4294901760
  %930 = vmatmul.f32.gmra.mxu0 %v929
  %v931 = vpop.f32.mrf.mxu0
  %v932 = vadd.f32 %v883, %v931
  %933 = vdwg.mxu0
  %934 = vmatpush.msra.mxu0 0.0
  %935 = vmatpush.msra.mxu0 0.0
  %936 = vmatpush.msra.mxu0 0.0
  %937 = vmatpush.msra.mxu0 0.0
  %938 = vmatpush.msra.mxu0 0.0
  %939 = vmatpush.msra.mxu0 0.0
  %940 = vmatpush.msra.mxu0 0.0
  %941 = vmatpush.msra.mxu0 0.0
  %v942 = vand.u32 %v684, 4294901760
  %943 = vmatpush.msra.mxu0 %v942
  %v944 = vand.u32 %v682, 4294901760
  %945 = vmatpush.msra.mxu0 %v944
  %v946 = vand.u32 %v680, 4294901760
  %947 = vmatpush.msra.mxu0 %v946
  %v948 = vand.u32 %v678, 4294901760
  %949 = vmatpush.msra.mxu0 %v948
  %v950 = vand.u32 %v676, 4294901760
  %951 = vmatpush.msra.mxu0 %v950
  %v952 = vand.u32 %v674, 4294901760
  %953 = vmatpush.msra.mxu0 %v952
  %v954 = vand.u32 %v672, 4294901760
  %955 = vmatpush.msra.mxu0 %v954
  %v956 = vand.u32 %v670, 4294901760
  %957 = vmatpush.msra.mxu0 %v956
  %v958 = vand.u32 %v694, 4294901760
  %959 = vmatmul.f32.gmra.mxu0 %v958
  %v960 = vpop.f32.mrf.mxu0
  %v961 = vadd.f32 %v928, %v960
  %v962 = vand.u32 %v697, 4294901760
  %963 = vmatmul.f32.gmra.mxu0 %v962
  %v964 = vpop.f32.mrf.mxu0
  %v965 = vadd.f32 %v932, %v964
  %966 = vdwg.mxu0
  %967 = vmatpush.msra.mxu0 0.0
  %968 = vmatpush.msra.mxu0 0.0
  %969 = vmatpush.msra.mxu0 0.0
  %970 = vmatpush.msra.mxu0 0.0
  %971 = vmatpush.msra.mxu0 0.0
  %972 = vmatpush.msra.mxu0 0.0
  %973 = vmatpush.msra.mxu0 0.0
  %974 = vmatpush.msra.mxu0 0.0
  %v975 = vand.u32 %v259, 4294901760
  %976 = vmatpush.msra.mxu0 %v975
  %v977 = vand.u32 %v258, 4294901760
  %978 = vmatpush.msra.mxu0 %v977
  %v979 = vand.u32 %v257, 4294901760
  %980 = vmatpush.msra.mxu0 %v979
  %v981 = vand.u32 %v256, 4294901760
  %982 = vmatpush.msra.mxu0 %v981
  %v983 = vand.u32 %v255, 4294901760
  %984 = vmatpush.msra.mxu0 %v983
  %v985 = vand.u32 %v254, 4294901760
  %986 = vmatpush.msra.mxu0 %v985
  %v987 = vand.u32 %v253, 4294901760
  %988 = vmatpush.msra.mxu0 %v987
  %v989 = vand.u32 %v252, 4294901760
  %990 = vmatpush.msra.mxu0 %v989
  %v991 = vand.u32 %v694, 4294901760
  %v992 = vsub.f32 %v694, %v991
  %v993 = vand.u32 %v992, 4294901760
  %v994 = vsub.f32 %v992, %v993
  %v995 = vand.u32 %v994, 4294901760
  %996 = vmatmul.f32.gmra.mxu0 %v995
  %v997 = vpop.f32.mrf.mxu0
  %v998 = vadd.f32 0.0, %v997
  %v999 = vand.u32 %v697, 4294901760
  %v1000 = vsub.f32 %v697, %v999
  %v1001 = vand.u32 %v1000, 4294901760
  %v1002 = vsub.f32 %v1000, %v1001
  %v1003 = vand.u32 %v1002, 4294901760
  %1004 = vmatmul.f32.gmra.mxu0 %v1003
  %v1005 = vpop.f32.mrf.mxu0
  %v1006 = vadd.f32 0.0, %v1005
  %1007 = vdwg.mxu0
  %1008 = vmatpush.msra.mxu0 0.0
  %1009 = vmatpush.msra.mxu0 0.0
  %1010 = vmatpush.msra.mxu0 0.0
  %1011 = vmatpush.msra.mxu0 0.0
  %1012 = vmatpush.msra.mxu0 0.0
  %1013 = vmatpush.msra.mxu0 0.0
  %1014 = vmatpush.msra.mxu0 0.0
  %1015 = vmatpush.msra.mxu0 0.0
  %v1016 = vand.u32 %v259, 4294901760
  %v1017 = vsub.f32 %v259, %v1016
  %v1018 = vand.u32 %v1017, 4294901760
  %v1019 = vsub.f32 %v1017, %v1018
  %v1020 = vand.u32 %v1019, 4294901760
  %1021 = vmatpush.msra.mxu0 %v1020
  %v1022 = vand.u32 %v258, 4294901760
  %v1023 = vsub.f32 %v258, %v1022
  %v1024 = vand.u32 %v1023, 4294901760
  %v1025 = vsub.f32 %v1023, %v1024
  %v1026 = vand.u32 %v1025, 4294901760
  %1027 = vmatpush.msra.mxu0 %v1026
  %v1028 = vand.u32 %v257, 4294901760
  %v1029 = vsub.f32 %v257, %v1028
  %v1030 = vand.u32 %v1029, 4294901760
  %v1031 = vsub.f32 %v1029, %v1030
  %v1032 = vand.u32 %v1031, 4294901760
  %1033 = vmatpush.msra.mxu0 %v1032
  %v1034 = vand.u32 %v256, 4294901760
  %v1035 = vsub.f32 %v256, %v1034
  %v1036 = vand.u32 %v1035, 4294901760
  %v1037 = vsub.f32 %v1035, %v1036
  %v1038 = vand.u32 %v1037, 4294901760
  %1039 = vmatpush.msra.mxu0 %v1038
  %v1040 = vand.u32 %v255, 4294901760
  %v1041 = vsub.f32 %v255, %v1040
  %v1042 = vand.u32 %v1041, 4294901760
  %v1043 = vsub.f32 %v1041, %v1042
  %v1044 = vand.u32 %v1043, 4294901760
  %1045 = vmatpush.msra.mxu0 %v1044
  %v1046 = vand.u32 %v254, 4294901760
  %v1047 = vsub.f32 %v254, %v1046
  %v1048 = vand.u32 %v1047, 4294901760
  %v1049 = vsub.f32 %v1047, %v1048
  %v1050 = vand.u32 %v1049, 4294901760
  %1051 = vmatpush.msra.mxu0 %v1050
  %v1052 = vand.u32 %v253, 4294901760
  %v1053 = vsub.f32 %v253, %v1052
  %v1054 = vand.u32 %v1053, 4294901760
  %v1055 = vsub.f32 %v1053, %v1054
  %v1056 = vand.u32 %v1055, 4294901760
  %1057 = vmatpush.msra.mxu0 %v1056
  %v1058 = vand.u32 %v252, 4294901760
  %v1059 = vsub.f32 %v252, %v1058
  %v1060 = vand.u32 %v1059, 4294901760
  %v1061 = vsub.f32 %v1059, %v1060
  %v1062 = vand.u32 %v1061, 4294901760
  %1063 = vmatpush.msra.mxu0 %v1062
  %v1064 = vand.u32 %v694, 4294901760
  %1065 = vmatmul.f32.gmra.mxu0 %v1064
  %v1066 = vpop.f32.mrf.mxu0
  %v1067 = vadd.f32 %v998, %v1066
  %v1068 = vand.u32 %v697, 4294901760
  %1069 = vmatmul.f32.gmra.mxu0 %v1068
  %v1070 = vpop.f32.mrf.mxu0
  %v1071 = vadd.f32 %v1006, %v1070
  %1072 = vdwg.mxu0
  %1073 = vmatpush.msra.mxu0 0.0
  %1074 = vmatpush.msra.mxu0 0.0
  %1075 = vmatpush.msra.mxu0 0.0
  %1076 = vmatpush.msra.mxu0 0.0
  %1077 = vmatpush.msra.mxu0 0.0
  %1078 = vmatpush.msra.mxu0 0.0
  %1079 = vmatpush.msra.mxu0 0.0
  %1080 = vmatpush.msra.mxu0 0.0
  %v1081 = vand.u32 %v259, 4294901760
  %v1082 = vsub.f32 %v259, %v1081
  %1083 = vmatpush.msra.mxu0 %v1082
  %v1084 = vand.u32 %v258, 4294901760
  %v1085 = vsub.f32 %v258, %v1084
  %1086 = vmatpush.msra.mxu0 %v1085
  %v1087 = vand.u32 %v257, 4294901760
  %v1088 = vsub.f32 %v257, %v1087
  %1089 = vmatpush.msra.mxu0 %v1088
  %v1090 = vand.u32 %v256, 4294901760
  %v1091 = vsub.f32 %v256, %v1090
  %1092 = vmatpush.msra.mxu0 %v1091
  %v1093 = vand.u32 %v255, 4294901760
  %v1094 = vsub.f32 %v255, %v1093
  %1095 = vmatpush.msra.mxu0 %v1094
  %v1096 = vand.u32 %v254, 4294901760
  %v1097 = vsub.f32 %v254, %v1096
  %1098 = vmatpush.msra.mxu0 %v1097
  %v1099 = vand.u32 %v253, 4294901760
  %v1100 = vsub.f32 %v253, %v1099
  %1101 = vmatpush.msra.mxu0 %v1100
  %v1102 = vand.u32 %v252, 4294901760
  %v1103 = vsub.f32 %v252, %v1102
  %1104 = vmatpush.msra.mxu0 %v1103
  %v1105 = vand.u32 %v694, 4294901760
  %v1106 = vsub.f32 %v694, %v1105
  %1107 = vmatmul.f32.gmra.mxu0 %v1106
  %v1108 = vpop.f32.mrf.mxu0
  %v1109 = vadd.f32 %v1067, %v1108
  %v1110 = vand.u32 %v697, 4294901760
  %v1111 = vsub.f32 %v697, %v1110
  %1112 = vmatmul.f32.gmra.mxu0 %v1111
  %v1113 = vpop.f32.mrf.mxu0
  %v1114 = vadd.f32 %v1071, %v1113
  %1115 = vdwg.mxu0
  %1116 = vmatpush.msra.mxu0 0.0
  %1117 = vmatpush.msra.mxu0 0.0
  %1118 = vmatpush.msra.mxu0 0.0
  %1119 = vmatpush.msra.mxu0 0.0
  %1120 = vmatpush.msra.mxu0 0.0
  %1121 = vmatpush.msra.mxu0 0.0
  %1122 = vmatpush.msra.mxu0 0.0
  %1123 = vmatpush.msra.mxu0 0.0
  %v1124 = vand.u32 %v259, 4294901760
  %1125 = vmatpush.msra.mxu0 %v1124
  %v1126 = vand.u32 %v258, 4294901760
  %1127 = vmatpush.msra.mxu0 %v1126
  %v1128 = vand.u32 %v257, 4294901760
  %1129 = vmatpush.msra.mxu0 %v1128
  %v1130 = vand.u32 %v256, 4294901760
  %1131 = vmatpush.msra.mxu0 %v1130
  %v1132 = vand.u32 %v255, 4294901760
  %1133 = vmatpush.msra.mxu0 %v1132
  %v1134 = vand.u32 %v254, 4294901760
  %1135 = vmatpush.msra.mxu0 %v1134
  %v1136 = vand.u32 %v253, 4294901760
  %1137 = vmatpush.msra.mxu0 %v1136
  %v1138 = vand.u32 %v252, 4294901760
  %1139 = vmatpush.msra.mxu0 %v1138
  %v1140 = vand.u32 %v694, 4294901760
  %v1141 = vsub.f32 %v694, %v1140
  %v1142 = vand.u32 %v1141, 4294901760
  %1143 = vmatmul.f32.gmra.mxu0 %v1142
  %v1144 = vpop.f32.mrf.mxu0
  %v1145 = vadd.f32 %v1109, %v1144
  %v1146 = vand.u32 %v697, 4294901760
  %v1147 = vsub.f32 %v697, %v1146
  %v1148 = vand.u32 %v1147, 4294901760
  %1149 = vmatmul.f32.gmra.mxu0 %v1148
  %v1150 = vpop.f32.mrf.mxu0
  %v1151 = vadd.f32 %v1114, %v1150
  %1152 = vdwg.mxu0
  %1153 = vmatpush.msra.mxu0 0.0
  %1154 = vmatpush.msra.mxu0 0.0
  %1155 = vmatpush.msra.mxu0 0.0
  %1156 = vmatpush.msra.mxu0 0.0
  %1157 = vmatpush.msra.mxu0 0.0
  %1158 = vmatpush.msra.mxu0 0.0
  %1159 = vmatpush.msra.mxu0 0.0
  %1160 = vmatpush.msra.mxu0 0.0
  %v1161 = vand.u32 %v259, 4294901760
  %v1162 = vsub.f32 %v259, %v1161
  %v1163 = vand.u32 %v1162, 4294901760
  %1164 = vmatpush.msra.mxu0 %v1163
  %v1165 = vand.u32 %v258, 4294901760
  %v1166 = vsub.f32 %v258, %v1165
  %v1167 = vand.u32 %v1166, 4294901760
  %1168 = vmatpush.msra.mxu0 %v1167
  %v1169 = vand.u32 %v257, 4294901760
  %v1170 = vsub.f32 %v257, %v1169
  %v1171 = vand.u32 %v1170, 4294901760
  %1172 = vmatpush.msra.mxu0 %v1171
  %v1173 = vand.u32 %v256, 4294901760
  %v1174 = vsub.f32 %v256, %v1173
  %v1175 = vand.u32 %v1174, 4294901760
  %1176 = vmatpush.msra.mxu0 %v1175
  %v1177 = vand.u32 %v255, 4294901760
  %v1178 = vsub.f32 %v255, %v1177
  %v1179 = vand.u32 %v1178, 4294901760
  %1180 = vmatpush.msra.mxu0 %v1179
  %v1181 = vand.u32 %v254, 4294901760
  %v1182 = vsub.f32 %v254, %v1181
  %v1183 = vand.u32 %v1182, 4294901760
  %1184 = vmatpush.msra.mxu0 %v1183
  %v1185 = vand.u32 %v253, 4294901760
  %v1186 = vsub.f32 %v253, %v1185
  %v1187 = vand.u32 %v1186, 4294901760
  %1188 = vmatpush.msra.mxu0 %v1187
  %v1189 = vand.u32 %v252, 4294901760
  %v1190 = vsub.f32 %v252, %v1189
  %v1191 = vand.u32 %v1190, 4294901760
  %1192 = vmatpush.msra.mxu0 %v1191
  %v1193 = vand.u32 %v694, 4294901760
  %1194 = vmatmul.f32.gmra.mxu0 %v1193
  %v1195 = vpop.f32.mrf.mxu0
  %v1196 = vadd.f32 %v1145, %v1195
  %v1197 = vand.u32 %v697, 4294901760
  %1198 = vmatmul.f32.gmra.mxu0 %v1197
  %v1199 = vpop.f32.mrf.mxu0
  %v1200 = vadd.f32 %v1151, %v1199
  %1201 = vdwg.mxu0
  %1202 = vmatpush.msra.mxu0 0.0
  %1203 = vmatpush.msra.mxu0 0.0
  %1204 = vmatpush.msra.mxu0 0.0
  %1205 = vmatpush.msra.mxu0 0.0
  %1206 = vmatpush.msra.mxu0 0.0
  %1207 = vmatpush.msra.mxu0 0.0
  %1208 = vmatpush.msra.mxu0 0.0
  %1209 = vmatpush.msra.mxu0 0.0
  %v1210 = vand.u32 %v259, 4294901760
  %1211 = vmatpush.msra.mxu0 %v1210
  %v1212 = vand.u32 %v258, 4294901760
  %1213 = vmatpush.msra.mxu0 %v1212
  %v1214 = vand.u32 %v257, 4294901760
  %1215 = vmatpush.msra.mxu0 %v1214
  %v1216 = vand.u32 %v256, 4294901760
  %1217 = vmatpush.msra.mxu0 %v1216
  %v1218 = vand.u32 %v255, 4294901760
  %1219 = vmatpush.msra.mxu0 %v1218
  %v1220 = vand.u32 %v254, 4294901760
  %1221 = vmatpush.msra.mxu0 %v1220
  %v1222 = vand.u32 %v253, 4294901760
  %1223 = vmatpush.msra.mxu0 %v1222
  %v1224 = vand.u32 %v252, 4294901760
  %1225 = vmatpush.msra.mxu0 %v1224
  %v1226 = vand.u32 %v694, 4294901760
  %1227 = vmatmul.f32.gmra.mxu0 %v1226
  %v1228 = vpop.f32.mrf.mxu0
  %v1229 = vadd.f32 %v1196, %v1228
  %v1230 = vand.u32 %v697, 4294901760
  %1231 = vmatmul.f32.gmra.mxu0 %v1230
  %v1232 = vpop.f32.mrf.mxu0
  %v1233 = vadd.f32 %v1200, %v1232
  %1234 = vdwg.mxu0
  %v1235 = vrcp.pop %v1229
  %v1236 = vmul.f32 %v1229, %v1235
  %v1237 = vsub.f32 1.0, %v1236
  %v1238 = vmul.f32 %v1235, %v1237
  %v1239 = vadd.f32 %v1235, %v1238
  %vm1240 = vweird.f32 %v1229
  %vm1241 = vweird.f32 %v1235
  %vm1242 = vmor %vm1240, %vm1241
  %v1243 = vsel %vm1242, %v1235, %v1239
  %v1244 = vand.u32 2147483647, %v1229
  %vm1245 = vcmp.eq.f32.partialorder %v1244, 8.507059e+37
  %v1246 = vand.u32 %v1229, 2147483648
  %v1247 = vor.u32 1.1754944e-38, %v1246
  %v1248 = vsel %vm1245, %v1247, %v1243
  %v1249 = vmul.f32 %v961, %v1248
  %v1250 = vrcp.pop %v1233
  %v1251 = vmul.f32 %v1233, %v1250
  %v1252 = vsub.f32 1.0, %v1251
  %v1253 = vmul.f32 %v1250, %v1252
  %v1254 = vadd.f32 %v1250, %v1253
  %vm1255 = vweird.f32 %v1233
  %vm1256 = vweird.f32 %v1250
  %vm1257 = vmor %vm1255, %vm1256
  %v1258 = vsel %vm1257, %v1250, %v1254
  %v1259 = vand.u32 2147483647, %v1233
  %vm1260 = vcmp.eq.f32.partialorder %v1259, 8.507059e+37
  %v1261 = vand.u32 %v1233, 2147483648
  %v1262 = vor.u32 1.1754944e-38, %v1261
  %v1263 = vsel %vm1260, %v1262, %v1258
  %v1264 = vmul.f32 %v965, %v1263
  %v1265 = vld [vmem:[%s2] sm:$0xff]
  %v1266 = vld [vmem:[%s2 + $0x8] sm:$0xff]
  %v1267 = vld [vmem:[%s2 + $0x10] sm:$0xff]
  %v1268 = vld [vmem:[%s2 + $0x18] sm:$0xff]
  %v1269 = vld [vmem:[%s3] sm:$0x1]
  %v1271 = vperm.slane %v1269, 0
  %v1274 = vsel %vm29, %v1249, 0
  %v1277 = vsel %vm29, %v1264, 0
  %1279 = vmatpush.msra.mxu0 0.0
  %1280 = vmatpush.msra.mxu0 0.0
  %1281 = vmatpush.msra.mxu0 0.0
  %1282 = vmatpush.msra.mxu0 0.0
  %1283 = vmatpush.msra.mxu0 0.0
  %1284 = vmatpush.msra.mxu0 0.0
  %1285 = vmatpush.msra.mxu0 0.0
  %1286 = vmatpush.msra.mxu0 0.0
  %1287 = vmatpush.msra.mxu0 0.0
  %1288 = vmatpush.msra.mxu0 0.0
  %1289 = vmatpush.msra.mxu0 0.0
  %1290 = vmatpush.msra.mxu0 0.0
  %v1291 = vand.u32 %v1268, 4294901760
  %1292 = vmatpush.msra.mxu0 %v1291
  %v1293 = vand.u32 %v1267, 4294901760
  %1294 = vmatpush.msra.mxu0 %v1293
  %v1295 = vand.u32 %v1266, 4294901760
  %1296 = vmatpush.msra.mxu0 %v1295
  %v1297 = vand.u32 %v1265, 4294901760
  %1298 = vmatpush.msra.mxu0 %v1297
  %v1299 = vand.u32 %v1274, 4294901760
  %v1300 = vsub.f32 %v1274, %v1299
  %v1301 = vand.u32 %v1300, 4294901760
  %v1302 = vsub.f32 %v1300, %v1301
  %v1303 = vand.u32 %v1302, 4294901760
  %1304 = vmatmul.f32.gmra.mxu0 %v1303
  %v1305 = vpop.f32.mrf.mxu0
  %v1306 = vadd.f32 %v1271, %v1305
  %v1307 = vand.u32 %v1277, 4294901760
  %v1308 = vsub.f32 %v1277, %v1307
  %v1309 = vand.u32 %v1308, 4294901760
  %v1310 = vsub.f32 %v1308, %v1309
  %v1311 = vand.u32 %v1310, 4294901760
  %1312 = vmatmul.f32.gmra.mxu0 %v1311
  %v1313 = vpop.f32.mrf.mxu0
  %v1314 = vadd.f32 %v1271, %v1313
  %1315 = vdwg.mxu0
  %1316 = vmatpush.msra.mxu0 0.0
  %1317 = vmatpush.msra.mxu0 0.0
  %1318 = vmatpush.msra.mxu0 0.0
  %1319 = vmatpush.msra.mxu0 0.0
  %1320 = vmatpush.msra.mxu0 0.0
  %1321 = vmatpush.msra.mxu0 0.0
  %1322 = vmatpush.msra.mxu0 0.0
  %1323 = vmatpush.msra.mxu0 0.0
  %1324 = vmatpush.msra.mxu0 0.0
  %1325 = vmatpush.msra.mxu0 0.0
  %1326 = vmatpush.msra.mxu0 0.0
  %1327 = vmatpush.msra.mxu0 0.0
  %v1328 = vand.u32 %v1268, 4294901760
  %v1329 = vsub.f32 %v1268, %v1328
  %v1330 = vand.u32 %v1329, 4294901760
  %v1331 = vsub.f32 %v1329, %v1330
  %v1332 = vand.u32 %v1331, 4294901760
  %1333 = vmatpush.msra.mxu0 %v1332
  %v1334 = vand.u32 %v1267, 4294901760
  %v1335 = vsub.f32 %v1267, %v1334
  %v1336 = vand.u32 %v1335, 4294901760
  %v1337 = vsub.f32 %v1335, %v1336
  %v1338 = vand.u32 %v1337, 4294901760
  %1339 = vmatpush.msra.mxu0 %v1338
  %v1340 = vand.u32 %v1266, 4294901760
  %v1341 = vsub.f32 %v1266, %v1340
  %v1342 = vand.u32 %v1341, 4294901760
  %v1343 = vsub.f32 %v1341, %v1342
  %v1344 = vand.u32 %v1343, 4294901760
  %1345 = vmatpush.msra.mxu0 %v1344
  %v1346 = vand.u32 %v1265, 4294901760
  %v1347 = vsub.f32 %v1265, %v1346
  %v1348 = vand.u32 %v1347, 4294901760
  %v1349 = vsub.f32 %v1347, %v1348
  %v1350 = vand.u32 %v1349, 4294901760
  %1351 = vmatpush.msra.mxu0 %v1350
  %v1352 = vand.u32 %v1274, 4294901760
  %1353 = vmatmul.f32.gmra.mxu0 %v1352
  %v1354 = vpop.f32.mrf.mxu0
  %v1355 = vadd.f32 %v1306, %v1354
  %v1356 = vand.u32 %v1277, 4294901760
  %1357 = vmatmul.f32.gmra.mxu0 %v1356
  %v1358 = vpop.f32.mrf.mxu0
  %v1359 = vadd.f32 %v1314, %v1358
  %1360 = vdwg.mxu0
  %1361 = vmatpush.msra.mxu0 0.0
  %1362 = vmatpush.msra.mxu0 0.0
  %1363 = vmatpush.msra.mxu0 0.0
  %1364 = vmatpush.msra.mxu0 0.0
  %1365 = vmatpush.msra.mxu0 0.0
  %1366 = vmatpush.msra.mxu0 0.0
  %1367 = vmatpush.msra.mxu0 0.0
  %1368 = vmatpush.msra.mxu0 0.0
  %1369 = vmatpush.msra.mxu0 0.0
  %1370 = vmatpush.msra.mxu0 0.0
  %1371 = vmatpush.msra.mxu0 0.0
  %1372 = vmatpush.msra.mxu0 0.0
  %v1373 = vand.u32 %v1268, 4294901760
  %v1374 = vsub.f32 %v1268, %v1373
  %1375 = vmatpush.msra.mxu0 %v1374
  %v1376 = vand.u32 %v1267, 4294901760
  %v1377 = vsub.f32 %v1267, %v1376
  %1378 = vmatpush.msra.mxu0 %v1377
  %v1379 = vand.u32 %v1266, 4294901760
  %v1380 = vsub.f32 %v1266, %v1379
  %1381 = vmatpush.msra.mxu0 %v1380
  %v1382 = vand.u32 %v1265, 4294901760
  %v1383 = vsub.f32 %v1265, %v1382
  %1384 = vmatpush.msra.mxu0 %v1383
  %v1385 = vand.u32 %v1274, 4294901760
  %v1386 = vsub.f32 %v1274, %v1385
  %1387 = vmatmul.f32.gmra.mxu0 %v1386
  %v1388 = vpop.f32.mrf.mxu0
  %v1389 = vadd.f32 %v1355, %v1388
  %v1390 = vand.u32 %v1277, 4294901760
  %v1391 = vsub.f32 %v1277, %v1390
  %1392 = vmatmul.f32.gmra.mxu0 %v1391
  %v1393 = vpop.f32.mrf.mxu0
  %v1394 = vadd.f32 %v1359, %v1393
  %1395 = vdwg.mxu0
  %1396 = vmatpush.msra.mxu0 0.0
  %1397 = vmatpush.msra.mxu0 0.0
  %1398 = vmatpush.msra.mxu0 0.0
  %1399 = vmatpush.msra.mxu0 0.0
  %1400 = vmatpush.msra.mxu0 0.0
  %1401 = vmatpush.msra.mxu0 0.0
  %1402 = vmatpush.msra.mxu0 0.0
  %1403 = vmatpush.msra.mxu0 0.0
  %1404 = vmatpush.msra.mxu0 0.0
  %1405 = vmatpush.msra.mxu0 0.0
  %1406 = vmatpush.msra.mxu0 0.0
  %1407 = vmatpush.msra.mxu0 0.0
  %v1408 = vand.u32 %v1268, 4294901760
  %1409 = vmatpush.msra.mxu0 %v1408
  %v1410 = vand.u32 %v1267, 4294901760
  %1411 = vmatpush.msra.mxu0 %v1410
  %v1412 = vand.u32 %v1266, 4294901760
  %1413 = vmatpush.msra.mxu0 %v1412
  %v1414 = vand.u32 %v1265, 4294901760
  %1415 = vmatpush.msra.mxu0 %v1414
  %v1416 = vand.u32 %v1274, 4294901760
  %v1417 = vsub.f32 %v1274, %v1416
  %v1418 = vand.u32 %v1417, 4294901760
  %1419 = vmatmul.f32.gmra.mxu0 %v1418
  %v1420 = vpop.f32.mrf.mxu0
  %v1421 = vadd.f32 %v1389, %v1420
  %v1422 = vand.u32 %v1277, 4294901760
  %v1423 = vsub.f32 %v1277, %v1422
  %v1424 = vand.u32 %v1423, 4294901760
  %1425 = vmatmul.f32.gmra.mxu0 %v1424
  %v1426 = vpop.f32.mrf.mxu0
  %v1427 = vadd.f32 %v1394, %v1426
  %1428 = vdwg.mxu0
  %1429 = vmatpush.msra.mxu0 0.0
  %1430 = vmatpush.msra.mxu0 0.0
  %1431 = vmatpush.msra.mxu0 0.0
  %1432 = vmatpush.msra.mxu0 0.0
  %1433 = vmatpush.msra.mxu0 0.0
  %1434 = vmatpush.msra.mxu0 0.0
  %1435 = vmatpush.msra.mxu0 0.0
  %1436 = vmatpush.msra.mxu0 0.0
  %1437 = vmatpush.msra.mxu0 0.0
  %1438 = vmatpush.msra.mxu0 0.0
  %1439 = vmatpush.msra.mxu0 0.0
  %1440 = vmatpush.msra.mxu0 0.0
  %v1441 = vand.u32 %v1268, 4294901760
  %v1442 = vsub.f32 %v1268, %v1441
  %v1443 = vand.u32 %v1442, 4294901760
  %1444 = vmatpush.msra.mxu0 %v1443
  %v1445 = vand.u32 %v1267, 4294901760
  %v1446 = vsub.f32 %v1267, %v1445
  %v1447 = vand.u32 %v1446, 4294901760
  %1448 = vmatpush.msra.mxu0 %v1447
  %v1449 = vand.u32 %v1266, 4294901760
  %v1450 = vsub.f32 %v1266, %v1449
  %v1451 = vand.u32 %v1450, 4294901760
  %1452 = vmatpush.msra.mxu0 %v1451
  %v1453 = vand.u32 %v1265, 4294901760
  %v1454 = vsub.f32 %v1265, %v1453
  %v1455 = vand.u32 %v1454, 4294901760
  %1456 = vmatpush.msra.mxu0 %v1455
  %v1457 = vand.u32 %v1274, 4294901760
  %1458 = vmatmul.f32.gmra.mxu0 %v1457
  %v1459 = vpop.f32.mrf.mxu0
  %v1460 = vadd.f32 %v1421, %v1459
  %v1461 = vand.u32 %v1277, 4294901760
  %1462 = vmatmul.f32.gmra.mxu0 %v1461
  %v1463 = vpop.f32.mrf.mxu0
  %v1464 = vadd.f32 %v1427, %v1463
  %1465 = vdwg.mxu0
  %1466 = vmatpush.msra.mxu0 0.0
  %1467 = vmatpush.msra.mxu0 0.0
  %1468 = vmatpush.msra.mxu0 0.0
  %1469 = vmatpush.msra.mxu0 0.0
  %1470 = vmatpush.msra.mxu0 0.0
  %1471 = vmatpush.msra.mxu0 0.0
  %1472 = vmatpush.msra.mxu0 0.0
  %1473 = vmatpush.msra.mxu0 0.0
  %1474 = vmatpush.msra.mxu0 0.0
  %1475 = vmatpush.msra.mxu0 0.0
  %1476 = vmatpush.msra.mxu0 0.0
  %1477 = vmatpush.msra.mxu0 0.0
  %v1478 = vand.u32 %v1268, 4294901760
  %1479 = vmatpush.msra.mxu0 %v1478
  %v1480 = vand.u32 %v1267, 4294901760
  %1481 = vmatpush.msra.mxu0 %v1480
  %v1482 = vand.u32 %v1266, 4294901760
  %1483 = vmatpush.msra.mxu0 %v1482
  %v1484 = vand.u32 %v1265, 4294901760
  %1485 = vmatpush.msra.mxu0 %v1484
  %v1486 = vand.u32 %v1274, 4294901760
  %1487 = vmatmul.f32.gmra.mxu0 %v1486
  %v1488 = vpop.f32.mrf.mxu0
  %v1489 = vadd.f32 %v1460, %v1488
  %v1490 = vand.u32 %v1277, 4294901760
  %1491 = vmatmul.f32.gmra.mxu0 %v1490
  %v1492 = vpop.f32.mrf.mxu0
  %v1493 = vadd.f32 %v1464, %v1492
  %1494 = vdwg.mxu0
  %1495 = vst [vmem:[%s6] sm:$0xff] %v1489
  %1496 = vst [vmem:[%s6 + $0x8] sm:$0xff] %v1493
  // Predicated region
  $region26: #{multi_head_attention.1} parent=0 // pred_check
    _
  $region27: #{multi_head_attention.1} parent=0 // pred_check_branch
    %1498 = sbr.rel (0) target = $region29
  $region28: #{multi_head_attention.1} parent=0 // pred_region
    _
  $region29: #{multi_head_attention.1} parent=0 // pred_fallthru
    _
  // Predicated region
  $region30: #{multi_head_attention.1} parent=0 // pred_check
    _
  $region31: #{multi_head_attention.1} parent=0 // pred_check_branch
    %1500 = sbr.rel (0) target = $region33
  $region32: #{multi_head_attention.1} parent=0 // pred_region
    _
  $region33: #{multi_head_attention.1} parent=0 // pred_fallthru
    _

</llo_original>
